<compile_context>
chip_gen: v7x
topology: tpu7x:2x2x1
jax: 0.10.0
libtpu: 0.0.40
codegen_flags: <defaults>
</compile_context>

<pallas_src>
import functools

import jax
import jax.numpy as jnp
from jax.experimental import pallas as pl
from jax.experimental.pallas import tpu as pltpu

EPS = 1e-5
K = 3  # kernel size (padding = 1)


def _mod(a, m):
    """a % m for non-negative a and static python int m (bit ops when m is pow2)."""
    if m & (m - 1) == 0:
        return jnp.bitwise_and(a, m - 1)
    return a % m  # TODO(synk): non-pow2 spatial dims take the slower integer path


def _div(a, m):
    """a // m for non-negative a and static python int m (shift when m is pow2)."""
    if m & (m - 1) == 0:
        return jnp.right_shift(a, m.bit_length() - 1)
    return a // m


def _residual_block_kernel(x_ref, w1_ref, b1_ref, w2_ref, b2_ref, o_ref,
                           patch_ref, *, H, W):
    """One grid step = Nb batch elements.

    x_ref     : (Nb, C, H*W)       input slab (channels x flattened spatial)
    w1_ref    : (C, 9*C) bf16      conv1 weights with BN1 scale folded in
    b1_ref    : (C, 1)   f32       BN1 shift (+ conv1 bias)
    w2_ref    : (C, 9*C) bf16      conv2 weights with BN2 scale folded in
    b2_ref    : (C, 1)   f32       BN2 shift (+ conv2 bias)
    o_ref     : (Nb, C, H*W)       output slab (lane-dense stores)
    patch_ref : (9*C, Nb*H*W) f32  im2col scratch -> ONE fused matmul per conv
    """
    Nb, C, HW = x_ref.shape
    L = Nb * HW

    # (C, Nb*HW): channels on sublanes, (batch-major, spatial-minor) on lanes.
    # Lane concat happens at multiples of HW (>= 128 lanes), so it is aligned.
    if Nb == 1:
        x = x_ref[0]
    else:
        x = jnp.concatenate([x_ref[i] for i in range(Nb)], axis=1)

    # Per-tap validity masks for padding=1, computed ONCE and shared by both
    # convs.  The spatial index of a lane is lane % HW, so the masks are
    # per-element correct; they also zero any cross-element wrap of the rolls.
    lane = jax.lax.broadcasted_iota(jnp.int32, (C, L), 1)
    hw = _mod(lane, HW)
    row = _div(hw, W)
    col = _mod(hw, W)
    top_ok, bot_ok = row >= 1, row <= H - 2
    left_ok, right_ok = col >= 1, col <= W - 2
    masks = []
    for ky in range(K):
        for kx in range(K):
            m = None
            if ky == 0:
                m = top_ok
            elif ky == K - 1:
                m = bot_ok
            if kx == 0:
                m = left_ok if m is None else jnp.logical_and(m, left_ok)
            elif kx == K - 1:
                m = right_ok if m is None else jnp.logical_and(m, right_ok)
            masks.append(m)

    def conv3x3(v, w_ref, b_ref):
        """3x3 same-conv of v (C, L) -> (C, L): 9 rolled taps + ONE MXU matmul."""
        for ky in range(K):
            for kx in range(K):
                t = ky * K + kx
                s = (ky - 1) * W + (kx - 1)        # flat spatial shift of this tap
                # patch[j] = v[j + s] for in-image taps; roll is on the XLU slot.
                p = v if s == 0 else pltpu.roll(v, shift=(-s) % L, axis=1)
                if masks[t] is not None:
                    p = jnp.where(masks[t], p, 0.0)
                patch_ref[t * C:(t + 1) * C, :] = p
        acc = jnp.dot(w_ref[...], patch_ref[...].astype(jnp.bfloat16),   # (C,9C)x(9C,L)
                      preferred_element_type=jnp.float32)                # bf16 MXU, f32 acc
        return acc + b_ref[...]                    # per-channel bias, lane broadcast

    y = jnp.maximum(conv3x3(x, w1_ref, b1_ref), 0.0)   # conv1 + BN1 + ReLU
    z = conv3x3(y, w2_ref, b2_ref)                     # conv2 + BN2
    out = x + z                                        # residual add (exact f32 path)
    for i in range(Nb):                                # lane-aligned per-element stores
        o_ref[i] = out[:, i * HW:(i + 1) * HW].astype(o_ref.dtype)


def _pick_nb(n, c, hw, max_nb=8, scratch_budget=8 << 20):
    """Batch elements per grid step: as many as possible while keeping >= 2 grid
    steps (so v7x's two TensorCores both get work) and a small im2col scratch."""
    cap = max(1, min(max_nb, scratch_budget // (K * K * c * hw * 4)))
    best = 1
    for nb in range(1, min(n, cap) + 1):
        if n % nb == 0 and n // nb >= 2:
            best = nb
    return best


def residual_block_pallas(x_nchw, params):
    """PyTorch-equivalent forward: x + net(x). Input/output are NCHW float32."""
    N, Cin, H, W = x_nchw.shape
    Cout = params['w1'].shape[0]
    assert Cin == Cout, "residual add requires in_channels == out_channels"
    C = Cout
    HW = H * W

    # NCHW -> (N, C, H*W): pure reshape (no transpose / pad HBM passes).
    x = x_nchw.reshape(N, C, HW).astype(jnp.float32)

    # torch conv weight (Cout, Cin, kH, kW) -> (Cout, 9*Cin); column = (ky*3+kx)*Cin + ci,
    # matching the row order of the im2col scratch.
    def taps(w):
        return jnp.transpose(w, (0, 2, 3, 1)).reshape(w.shape[0], K * K * w.shape[1])

    # Fold conv bias + eval-mode BN: scale into bf16 weight rows (MXU operands),
    # shift into an f32 per-channel bias.
    def fold(w, bias, gamma, beta, mean, var):
        s = gamma / jnp.sqrt(var + EPS)                            # (Cout,)
        wf = (taps(w) * s[:, None]).astype(jnp.bfloat16)           # (Cout, 9*Cin) bf16
        bf = (beta + s * (bias - mean)).reshape(-1, 1).astype(jnp.float32)
        return wf, bf

    w1f, b1f = fold(params['w1'], params['b1'], params['g1'], params['be1'],
                    params['m1'], params['v1'])
    w2f, b2f = fold(params['w2'], params['b2'], params['g2'], params['be2'],
                    params['m2'], params['v2'])

    Nb = _pick_nb(N, C, HW)
    kernel = functools.partial(_residual_block_kernel, H=H, W=W)

    out = pl.pallas_call(
        kernel,
        out_shape=jax.ShapeDtypeStruct((N, C, HW), jnp.float32),
        grid_spec=pltpu.PrefetchScalarGridSpec(
            num_scalar_prefetch=0,
            grid=(N // Nb,),
            in_specs=[
                pl.BlockSpec((Nb, C, HW), lambda b: (b, 0, 0)),
                pl.BlockSpec((C, K * K * C), lambda b: (0, 0)),
                pl.BlockSpec((C, 1), lambda b: (0, 0)),
                pl.BlockSpec((C, K * K * C), lambda b: (0, 0)),
                pl.BlockSpec((C, 1), lambda b: (0, 0)),
            ],
            out_specs=pl.BlockSpec((Nb, C, HW), lambda b: (b, 0, 0)),
            scratch_shapes=[
                pltpu.VMEM((K * K * C, Nb * HW), jnp.float32),   # im2col patches
            ],
        ),
        compiler_params=pltpu.CompilerParams(
            # batch steps are independent -> lets v7x shard them over its 2 TCs
            dimension_semantics=("parallel",),
            vmem_limit_bytes=32 * 1024 * 1024,
        ),
    )(x, w1f, b1f, w2f, b2f)

    return out.reshape(N, C, H, W)


def _reference_forward(x, p):
    """Pure-JAX (XLA, f32) reference of the PyTorch forward (eval-mode BN)."""
    def conv(x, w, b):
        y = jax.lax.conv_general_dilated(
            x, w, window_strides=(1, 1), padding=((1, 1), (1, 1)),
            dimension_numbers=('NCHW', 'OIHW', 'NCHW'))
        return y + b[None, :, None, None]

    def bn(x, gamma, beta, mean, var):
        return ((x - mean[None, :, None, None])
                / jnp.sqrt(var[None, :, None, None] + EPS)
                * gamma[None, :, None, None] + beta[None, :, None, None])

    y = conv(x, p['w1'], p['b1'])
    y = bn(y, p['g1'], p['be1'], p['m1'], p['v1'])
    y = jnp.maximum(y, 0.0)
    y = conv(y, p['w2'], p['b2'])
    y = bn(y, p['g2'], p['be2'], p['m2'], p['v2'])
    return x + y


def _init_params(key, cin, cout):
    ks = jax.random.split(key, 12)
    return {
        'w1': 0.1 * jax.random.normal(ks[0], (cout, cin, K, K), jnp.float32),
        'b1': 0.1 * jax.random.normal(ks[1], (cout,), jnp.float32),
        'g1': 1.0 + 0.1 * jax.random.normal(ks[2], (cout,), jnp.float32),
        'be1': 0.1 * jax.random.normal(ks[3], (cout,), jnp.float32),
        'm1': 0.1 * jax.random.normal(ks[4], (cout,), jnp.float32),
        'v1': jax.random.uniform(ks[5], (cout,), jnp.float32, 0.5, 1.5),
        'w2': 0.1 * jax.random.normal(ks[6], (cout, cout, K, K), jnp.float32),
        'b2': 0.1 * jax.random.normal(ks[7], (cout,), jnp.float32),
        'g2': 1.0 + 0.1 * jax.random.normal(ks[8], (cout,), jnp.float32),
        'be2': 0.1 * jax.random.normal(ks[9], (cout,), jnp.float32),
        'm2': 0.1 * jax.random.normal(ks[10], (cout,), jnp.float32),
        'v2': jax.random.uniform(ks[11], (cout,), jnp.float32, 0.5, 1.5),
    }


if __name__ == "__main__":
    key = jax.random.PRNGKey(0)
    k_x, k_p, k_x2 = jax.random.split(key, 3)

    N, C, H, W = 2, 4, 16, 16            # in_channels == out_channels == 4
    params = _init_params(k_p, C, C)

    # Primary check (N=2 -> Nb=1, grid of 2 parallel steps).
    x = jax.random.normal(k_x, (N, C, H, W), jnp.float32)
    out = jax.block_until_ready(residual_block_pallas(x, params))
    ref = _reference_forward(x, params)
    assert out.shape == ref.shape == (N, C, H, W)
    err = jnp.max(jnp.abs(out - ref))
    # bf16 MXU operands -> tolerance loosened vs. the all-f32 version.
    assert jnp.allclose(out, ref, atol=3e-2, rtol=3e-2), f"max abs err = {err}"

    # Batched-step check (N=8 -> Nb=4 per grid step; exercises the wide-RHS path).
    x8 = jax.random.normal(k_x2, (8, C, H, W), jnp.float32)
    out8 = jax.block_until_ready(residual_block_pallas(x8, params))
    ref8 = _reference_forward(x8, params)
    err8 = jnp.max(jnp.abs(out8 - ref8))
    assert jnp.allclose(out8, ref8, atol=3e-2, rtol=3e-2), f"max abs err = {err8}"

    print("KERNEL_OK")
</pallas_src>

<mosaic_0001>
module attributes {stable_mosaic.version = 11 : i64} {
  func.func @_residual_block_kernel(%arg0: i32, %arg1: memref<1x4x256xf32, #tpu.memory_space<vmem>>, %arg2: memref<4x36xbf16, #tpu.memory_space<vmem>>, %arg3: memref<4x1xf32, #tpu.memory_space<vmem>>, %arg4: memref<4x36xbf16, #tpu.memory_space<vmem>>, %arg5: memref<4x1xf32, #tpu.memory_space<vmem>>, %arg6: memref<1x4x256xf32, #tpu.memory_space<vmem>>, %arg7: memref<36x256xf32, #tpu.memory_space<vmem>>) attributes {dimension_semantics = [#tpu.dimension_semantics<parallel>], iteration_bounds = array<i64: 2>, scalar_prefetch = 0 : i64, scratch_operands = 1 : i64, tpu.core_type = #tpu.core_type<tc>, window_params = [{transform_indices = @transform_0, window_bounds = array<i64: 1, 4, 256>}, {pipeline_mode = #tpu.pipeline_mode<synchronous>, transform_indices = @transform_1, window_bounds = array<i64: 4, 36>}, {pipeline_mode = #tpu.pipeline_mode<synchronous>, transform_indices = @transform_2, window_bounds = array<i64: 4, 1>}, {pipeline_mode = #tpu.pipeline_mode<synchronous>, transform_indices = @transform_3, window_bounds = array<i64: 4, 36>}, {pipeline_mode = #tpu.pipeline_mode<synchronous>, transform_indices = @transform_4, window_bounds = array<i64: 4, 1>}, {transform_indices = @transform_5, window_bounds = array<i64: 1, 4, 256>}]} {
    %c0 = arith.constant 0 : index
    %c0_0 = arith.constant 0 : index
    %c0_1 = arith.constant 0 : index
    %0 = vector.load %arg1[%c0, %c0_0, %c0_1] : memref<1x4x256xf32, #tpu.memory_space<vmem>>, vector<1x4x256xf32>
    %1 = vector.shape_cast %0 : vector<1x4x256xf32> to vector<4x256xf32>
    %2 = tpu.iota {dimensions = array<i32: 1>} : vector<4x256xi32>
    %c255_i32 = arith.constant 255 : i32
    %3 = vector.broadcast %c255_i32 : i32 to vector<4x256xi32>
    %4 = arith.andi %2, %3 : vector<4x256xi32>
    %c4_i32 = arith.constant 4 : i32
    %5 = vector.broadcast %c4_i32 : i32 to vector<4x256xi32>
    %6 = arith.shrsi %4, %5 : vector<4x256xi32>
    %c15_i32 = arith.constant 15 : i32
    %7 = vector.broadcast %c15_i32 : i32 to vector<4x256xi32>
    %8 = arith.andi %4, %7 : vector<4x256xi32>
    %c1_i32 = arith.constant 1 : i32
    %9 = vector.broadcast %c1_i32 : i32 to vector<4x256xi32>
    %10 = arith.cmpi sge, %6, %9 : vector<4x256xi32>
    %c14_i32 = arith.constant 14 : i32
    %11 = vector.broadcast %c14_i32 : i32 to vector<4x256xi32>
    %12 = arith.cmpi sle, %6, %11 : vector<4x256xi32>
    %c1_i32_2 = arith.constant 1 : i32
    %13 = vector.broadcast %c1_i32_2 : i32 to vector<4x256xi32>
    %14 = arith.cmpi sge, %8, %13 : vector<4x256xi32>
    %c14_i32_3 = arith.constant 14 : i32
    %15 = vector.broadcast %c14_i32_3 : i32 to vector<4x256xi32>
    %16 = arith.cmpi sle, %8, %15 : vector<4x256xi32>
    %17 = arith.andi %10, %14 : vector<4x256xi1>
    %18 = arith.andi %10, %16 : vector<4x256xi1>
    %19 = arith.andi %12, %14 : vector<4x256xi1>
    %20 = arith.andi %12, %16 : vector<4x256xi1>
    %c17_i32 = arith.constant 17 : i32
    %21 = tpu.dynamic_rotate %1 by %c17_i32 dim 1 : vector<4x256xf32>, i32 -> vector<4x256xf32>
    %cst = arith.constant 0.000000e+00 : f32
    %22 = vector.broadcast %cst : f32 to vector<4x256xf32>
    %23 = arith.select %17, %21, %22 : vector<4x256xi1>, vector<4x256xf32>
    %c0_4 = arith.constant 0 : index
    %c0_5 = arith.constant 0 : index
    %24 = vector.load %arg7[%c0_4, %c0_5] : memref<36x256xf32, #tpu.memory_space<vmem>>, vector<4x256xf32>
    tpu.vector_store %arg7[%c0_4, %c0_5], %23 {strides = array<i32>} : memref<36x256xf32, #tpu.memory_space<vmem>>, vector<4x256xf32>,
    %c16_i32 = arith.constant 16 : i32
    %25 = tpu.dynamic_rotate %1 by %c16_i32 dim 1 : vector<4x256xf32>, i32 -> vector<4x256xf32>
    %cst_6 = arith.constant 0.000000e+00 : f32
    %26 = vector.broadcast %cst_6 : f32 to vector<4x256xf32>
    %27 = arith.select %10, %25, %26 : vector<4x256xi1>, vector<4x256xf32>
    %c4 = arith.constant 4 : index
    %c0_7 = arith.constant 0 : index
    %28 = vector.load %arg7[%c4, %c0_7] : memref<36x256xf32, #tpu.memory_space<vmem>>, vector<4x256xf32>
    tpu.vector_store %arg7[%c4, %c0_7], %27 {strides = array<i32>} : memref<36x256xf32, #tpu.memory_space<vmem>>, vector<4x256xf32>,
    %c15_i32_8 = arith.constant 15 : i32
    %29 = tpu.dynamic_rotate %1 by %c15_i32_8 dim 1 : vector<4x256xf32>, i32 -> vector<4x256xf32>
    %cst_9 = arith.constant 0.000000e+00 : f32
    %30 = vector.broadcast %cst_9 : f32 to vector<4x256xf32>
    %31 = arith.select %18, %29, %30 : vector<4x256xi1>, vector<4x256xf32>
    %c8 = arith.constant 8 : index
    %c0_10 = arith.constant 0 : index
    %32 = vector.load %arg7[%c8, %c0_10] : memref<36x256xf32, #tpu.memory_space<vmem>>, vector<4x256xf32>
    tpu.vector_store %arg7[%c8, %c0_10], %31 {strides = array<i32>} : memref<36x256xf32, #tpu.memory_space<vmem>>, vector<4x256xf32>,
    %c1_i32_11 = arith.constant 1 : i32
    %33 = tpu.dynamic_rotate %1 by %c1_i32_11 dim 1 : vector<4x256xf32>, i32 -> vector<4x256xf32>
    %cst_12 = arith.constant 0.000000e+00 : f32
    %34 = vector.broadcast %cst_12 : f32 to vector<4x256xf32>
    %35 = arith.select %14, %33, %34 : vector<4x256xi1>, vector<4x256xf32>
    %c12 = arith.constant 12 : index
    %c0_13 = arith.constant 0 : index
    %36 = vector.load %arg7[%c12, %c0_13] : memref<36x256xf32, #tpu.memory_space<vmem>>, vector<4x256xf32>
    tpu.vector_store %arg7[%c12, %c0_13], %35 {strides = array<i32>} : memref<36x256xf32, #tpu.memory_space<vmem>>, vector<4x256xf32>,
    %c16 = arith.constant 16 : index
    %c0_14 = arith.constant 0 : index
    %37 = vector.load %arg7[%c16, %c0_14] : memref<36x256xf32, #tpu.memory_space<vmem>>, vector<4x256xf32>
    tpu.vector_store %arg7[%c16, %c0_14], %1 {strides = array<i32>} : memref<36x256xf32, #tpu.memory_space<vmem>>, vector<4x256xf32>,
    %c255_i32_15 = arith.constant 255 : i32
    %38 = tpu.dynamic_rotate %1 by %c255_i32_15 dim 1 : vector<4x256xf32>, i32 -> vector<4x256xf32>
    %cst_16 = arith.constant 0.000000e+00 : f32
    %39 = vector.broadcast %cst_16 : f32 to vector<4x256xf32>
    %40 = arith.select %16, %38, %39 : vector<4x256xi1>, vector<4x256xf32>
    %c20 = arith.constant 20 : index
    %c0_17 = arith.constant 0 : index
    %41 = vector.load %arg7[%c20, %c0_17] : memref<36x256xf32, #tpu.memory_space<vmem>>, vector<4x256xf32>
    tpu.vector_store %arg7[%c20, %c0_17], %40 {strides = array<i32>} : memref<36x256xf32, #tpu.memory_space<vmem>>, vector<4x256xf32>,
    %c241_i32 = arith.constant 241 : i32
    %42 = tpu.dynamic_rotate %1 by %c241_i32 dim 1 : vector<4x256xf32>, i32 -> vector<4x256xf32>
    %cst_18 = arith.constant 0.000000e+00 : f32
    %43 = vector.broadcast %cst_18 : f32 to vector<4x256xf32>
    %44 = arith.select %19, %42, %43 : vector<4x256xi1>, vector<4x256xf32>
    %c24 = arith.constant 24 : index
    %c0_19 = arith.constant 0 : index
    %45 = vector.load %arg7[%c24, %c0_19] : memref<36x256xf32, #tpu.memory_space<vmem>>, vector<4x256xf32>
    tpu.vector_store %arg7[%c24, %c0_19], %44 {strides = array<i32>} : memref<36x256xf32, #tpu.memory_space<vmem>>, vector<4x256xf32>,
    %c240_i32 = arith.constant 240 : i32
    %46 = tpu.dynamic_rotate %1 by %c240_i32 dim 1 : vector<4x256xf32>, i32 -> vector<4x256xf32>
    %cst_20 = arith.constant 0.000000e+00 : f32
    %47 = vector.broadcast %cst_20 : f32 to vector<4x256xf32>
    %48 = arith.select %12, %46, %47 : vector<4x256xi1>, vector<4x256xf32>
    %c28 = arith.constant 28 : index
    %c0_21 = arith.constant 0 : index
    %49 = vector.load %arg7[%c28, %c0_21] : memref<36x256xf32, #tpu.memory_space<vmem>>, vector<4x256xf32>
    tpu.vector_store %arg7[%c28, %c0_21], %48 {strides = array<i32>} : memref<36x256xf32, #tpu.memory_space<vmem>>, vector<4x256xf32>,
    %c239_i32 = arith.constant 239 : i32
    %50 = tpu.dynamic_rotate %1 by %c239_i32 dim 1 : vector<4x256xf32>, i32 -> vector<4x256xf32>
    %cst_22 = arith.constant 0.000000e+00 : f32
    %51 = vector.broadcast %cst_22 : f32 to vector<4x256xf32>
    %52 = arith.select %20, %50, %51 : vector<4x256xi1>, vector<4x256xf32>
    %c32 = arith.constant 32 : index
    %c0_23 = arith.constant 0 : index
    %53 = vector.load %arg7[%c32, %c0_23] : memref<36x256xf32, #tpu.memory_space<vmem>>, vector<4x256xf32>
    tpu.vector_store %arg7[%c32, %c0_23], %52 {strides = array<i32>} : memref<36x256xf32, #tpu.memory_space<vmem>>, vector<4x256xf32>,
    %c0_24 = arith.constant 0 : index
    %c0_25 = arith.constant 0 : index
    %54 = vector.load %arg2[%c0_24, %c0_25] : memref<4x36xbf16, #tpu.memory_space<vmem>>, vector<4x36xbf16>
    %c0_26 = arith.constant 0 : index
    %c0_27 = arith.constant 0 : index
    %55 = vector.load %arg7[%c0_26, %c0_27] : memref<36x256xf32, #tpu.memory_space<vmem>>, vector<36x256xf32>
    %56 = arith.truncf %55 : vector<36x256xf32> to vector<36x256xbf16>
    %cst_28 = arith.constant dense<0.000000e+00> : vector<4x256xf32>
    %57 = tpu.matmul %54, %56, %cst_28 {dimension_numbers = #tpu.dot_dimension_numbers<[1], [0], [0], [1], [0, 0, 1, 1], [], []>} : vector<4x36xbf16>, vector<36x256xbf16>, vector<4x256xf32> -> vector<4x256xf32>
    %c0_29 = arith.constant 0 : index
    %c0_30 = arith.constant 0 : index
    %58 = vector.load %arg3[%c0_29, %c0_30] : memref<4x1xf32, #tpu.memory_space<vmem>>, vector<4x1xf32>
    %59 = vector.broadcast %58 : vector<4x1xf32> to vector<4x256xf32>
    %60 = arith.addf %57, %59 : vector<4x256xf32>
    %cst_31 = arith.constant 0.000000e+00 : f32
    %61 = vector.broadcast %cst_31 : f32 to vector<4x256xf32>
    %62 = arith.maximumf %60, %61 : vector<4x256xf32>
    %c17_i32_32 = arith.constant 17 : i32
    %63 = tpu.dynamic_rotate %62 by %c17_i32_32 dim 1 : vector<4x256xf32>, i32 -> vector<4x256xf32>
    %cst_33 = arith.constant 0.000000e+00 : f32
    %64 = vector.broadcast %cst_33 : f32 to vector<4x256xf32>
    %65 = arith.select %17, %63, %64 : vector<4x256xi1>, vector<4x256xf32>
    %c0_34 = arith.constant 0 : index
    %c0_35 = arith.constant 0 : index
    %66 = vector.load %arg7[%c0_34, %c0_35] : memref<36x256xf32, #tpu.memory_space<vmem>>, vector<4x256xf32>
    tpu.vector_store %arg7[%c0_34, %c0_35], %65 {strides = array<i32>} : memref<36x256xf32, #tpu.memory_space<vmem>>, vector<4x256xf32>,
    %c16_i32_36 = arith.constant 16 : i32
    %67 = tpu.dynamic_rotate %62 by %c16_i32_36 dim 1 : vector<4x256xf32>, i32 -> vector<4x256xf32>
    %cst_37 = arith.constant 0.000000e+00 : f32
    %68 = vector.broadcast %cst_37 : f32 to vector<4x256xf32>
    %69 = arith.select %10, %67, %68 : vector<4x256xi1>, vector<4x256xf32>
    %c4_38 = arith.constant 4 : index
    %c0_39 = arith.constant 0 : index
    %70 = vector.load %arg7[%c4_38, %c0_39] : memref<36x256xf32, #tpu.memory_space<vmem>>, vector<4x256xf32>
    tpu.vector_store %arg7[%c4_38, %c0_39], %69 {strides = array<i32>} : memref<36x256xf32, #tpu.memory_space<vmem>>, vector<4x256xf32>,
    %c15_i32_40 = arith.constant 15 : i32
    %71 = tpu.dynamic_rotate %62 by %c15_i32_40 dim 1 : vector<4x256xf32>, i32 -> vector<4x256xf32>
    %cst_41 = arith.constant 0.000000e+00 : f32
    %72 = vector.broadcast %cst_41 : f32 to vector<4x256xf32>
    %73 = arith.select %18, %71, %72 : vector<4x256xi1>, vector<4x256xf32>
    %c8_42 = arith.constant 8 : index
    %c0_43 = arith.constant 0 : index
    %74 = vector.load %arg7[%c8_42, %c0_43] : memref<36x256xf32, #tpu.memory_space<vmem>>, vector<4x256xf32>
    tpu.vector_store %arg7[%c8_42, %c0_43], %73 {strides = array<i32>} : memref<36x256xf32, #tpu.memory_space<vmem>>, vector<4x256xf32>,
    %c1_i32_44 = arith.constant 1 : i32
    %75 = tpu.dynamic_rotate %62 by %c1_i32_44 dim 1 : vector<4x256xf32>, i32 -> vector<4x256xf32>
    %cst_45 = arith.constant 0.000000e+00 : f32
    %76 = vector.broadcast %cst_45 : f32 to vector<4x256xf32>
    %77 = arith.select %14, %75, %76 : vector<4x256xi1>, vector<4x256xf32>
    %c12_46 = arith.constant 12 : index
    %c0_47 = arith.constant 0 : index
    %78 = vector.load %arg7[%c12_46, %c0_47] : memref<36x256xf32, #tpu.memory_space<vmem>>, vector<4x256xf32>
    tpu.vector_store %arg7[%c12_46, %c0_47], %77 {strides = array<i32>} : memref<36x256xf32, #tpu.memory_space<vmem>>, vector<4x256xf32>,
    %c16_48 = arith.constant 16 : index
    %c0_49 = arith.constant 0 : index
    %79 = vector.load %arg7[%c16_48, %c0_49] : memref<36x256xf32, #tpu.memory_space<vmem>>, vector<4x256xf32>
    tpu.vector_store %arg7[%c16_48, %c0_49], %62 {strides = array<i32>} : memref<36x256xf32, #tpu.memory_space<vmem>>, vector<4x256xf32>,
    %c255_i32_50 = arith.constant 255 : i32
    %80 = tpu.dynamic_rotate %62 by %c255_i32_50 dim 1 : vector<4x256xf32>, i32 -> vector<4x256xf32>
    %cst_51 = arith.constant 0.000000e+00 : f32
    %81 = vector.broadcast %cst_51 : f32 to vector<4x256xf32>
    %82 = arith.select %16, %80, %81 : vector<4x256xi1>, vector<4x256xf32>
    %c20_52 = arith.constant 20 : index
    %c0_53 = arith.constant 0 : index
    %83 = vector.load %arg7[%c20_52, %c0_53] : memref<36x256xf32, #tpu.memory_space<vmem>>, vector<4x256xf32>
    tpu.vector_store %arg7[%c20_52, %c0_53], %82 {strides = array<i32>} : memref<36x256xf32, #tpu.memory_space<vmem>>, vector<4x256xf32>,
    %c241_i32_54 = arith.constant 241 : i32
    %84 = tpu.dynamic_rotate %62 by %c241_i32_54 dim 1 : vector<4x256xf32>, i32 -> vector<4x256xf32>
    %cst_55 = arith.constant 0.000000e+00 : f32
    %85 = vector.broadcast %cst_55 : f32 to vector<4x256xf32>
    %86 = arith.select %19, %84, %85 : vector<4x256xi1>, vector<4x256xf32>
    %c24_56 = arith.constant 24 : index
    %c0_57 = arith.constant 0 : index
    %87 = vector.load %arg7[%c24_56, %c0_57] : memref<36x256xf32, #tpu.memory_space<vmem>>, vector<4x256xf32>
    tpu.vector_store %arg7[%c24_56, %c0_57], %86 {strides = array<i32>} : memref<36x256xf32, #tpu.memory_space<vmem>>, vector<4x256xf32>,
    %c240_i32_58 = arith.constant 240 : i32
    %88 = tpu.dynamic_rotate %62 by %c240_i32_58 dim 1 : vector<4x256xf32>, i32 -> vector<4x256xf32>
    %cst_59 = arith.constant 0.000000e+00 : f32
    %89 = vector.broadcast %cst_59 : f32 to vector<4x256xf32>
    %90 = arith.select %12, %88, %89 : vector<4x256xi1>, vector<4x256xf32>
    %c28_60 = arith.constant 28 : index
    %c0_61 = arith.constant 0 : index
    %91 = vector.load %arg7[%c28_60, %c0_61] : memref<36x256xf32, #tpu.memory_space<vmem>>, vector<4x256xf32>
    tpu.vector_store %arg7[%c28_60, %c0_61], %90 {strides = array<i32>} : memref<36x256xf32, #tpu.memory_space<vmem>>, vector<4x256xf32>,
    %c239_i32_62 = arith.constant 239 : i32
    %92 = tpu.dynamic_rotate %62 by %c239_i32_62 dim 1 : vector<4x256xf32>, i32 -> vector<4x256xf32>
    %cst_63 = arith.constant 0.000000e+00 : f32
    %93 = vector.broadcast %cst_63 : f32 to vector<4x256xf32>
    %94 = arith.select %20, %92, %93 : vector<4x256xi1>, vector<4x256xf32>
    %c32_64 = arith.constant 32 : index
    %c0_65 = arith.constant 0 : index
    %95 = vector.load %arg7[%c32_64, %c0_65] : memref<36x256xf32, #tpu.memory_space<vmem>>, vector<4x256xf32>
    tpu.vector_store %arg7[%c32_64, %c0_65], %94 {strides = array<i32>} : memref<36x256xf32, #tpu.memory_space<vmem>>, vector<4x256xf32>,
    %c0_66 = arith.constant 0 : index
    %c0_67 = arith.constant 0 : index
    %96 = vector.load %arg4[%c0_66, %c0_67] : memref<4x36xbf16, #tpu.memory_space<vmem>>, vector<4x36xbf16>
    %c0_68 = arith.constant 0 : index
    %c0_69 = arith.constant 0 : index
    %97 = vector.load %arg7[%c0_68, %c0_69] : memref<36x256xf32, #tpu.memory_space<vmem>>, vector<36x256xf32>
    %98 = arith.truncf %97 : vector<36x256xf32> to vector<36x256xbf16>
    %cst_70 = arith.constant dense<0.000000e+00> : vector<4x256xf32>
    %99 = tpu.matmul %96, %98, %cst_70 {dimension_numbers = #tpu.dot_dimension_numbers<[1], [0], [0], [1], [0, 0, 1, 1], [], []>} : vector<4x36xbf16>, vector<36x256xbf16>, vector<4x256xf32> -> vector<4x256xf32>
    %c0_71 = arith.constant 0 : index
    %c0_72 = arith.constant 0 : index
    %100 = vector.load %arg5[%c0_71, %c0_72] : memref<4x1xf32, #tpu.memory_space<vmem>>, vector<4x1xf32>
    %101 = vector.broadcast %100 : vector<4x1xf32> to vector<4x256xf32>
    %102 = arith.addf %99, %101 : vector<4x256xf32>
    %103 = arith.addf %1, %102 : vector<4x256xf32>
    %c0_73 = arith.constant 0 : index
    %c0_74 = arith.constant 0 : index
    %c0_75 = arith.constant 0 : index
    %104 = vector.load %arg6[%c0_73, %c0_74, %c0_75] : memref<1x4x256xf32, #tpu.memory_space<vmem>>, vector<1x4x256xf32>
    %105 = vector.shape_cast %104 : vector<1x4x256xf32> to vector<4x256xf32>
    %106 = vector.shape_cast %103 : vector<4x256xf32> to vector<1x4x256xf32>
    tpu.vector_store %arg6[%c0_73, %c0_74, %c0_75], %106 {strides = array<i32>} : memref<1x4x256xf32, #tpu.memory_space<vmem>>, vector<1x4x256xf32>,
    return
  }
  func.func @transform_0(%arg0: i32) -> (i32, i32, i32) {
    %c0_i32 = arith.constant 0 : i32
    %c0_i32_0 = arith.constant 0 : i32
    %c0_i32_1 = arith.constant 0 : i32
    return %arg0, %c0_i32, %c0_i32_0 : i32, i32, i32
  }
  func.func @transform_1(%arg0: i32) -> (i32, i32) {
    %c0_i32 = arith.constant 0 : i32
    %c0_i32_0 = arith.constant 0 : i32
    %c0_i32_1 = arith.constant 0 : i32
    return %c0_i32, %c0_i32_0 : i32, i32
  }
  func.func @transform_2(%arg0: i32) -> (i32, i32) {
    %c0_i32 = arith.constant 0 : i32
    %c0_i32_0 = arith.constant 0 : i32
    %c0_i32_1 = arith.constant 0 : i32
    return %c0_i32, %c0_i32_0 : i32, i32
  }
  func.func @transform_3(%arg0: i32) -> (i32, i32) {
    %c0_i32 = arith.constant 0 : i32
    %c0_i32_0 = arith.constant 0 : i32
    %c0_i32_1 = arith.constant 0 : i32
    return %c0_i32, %c0_i32_0 : i32, i32
  }
  func.func @transform_4(%arg0: i32) -> (i32, i32) {
    %c0_i32 = arith.constant 0 : i32
    %c0_i32_0 = arith.constant 0 : i32
    %c0_i32_1 = arith.constant 0 : i32
    return %c0_i32, %c0_i32_0 : i32, i32
  }
  func.func @transform_5(%arg0: i32) -> (i32, i32, i32) {
    %c0_i32 = arith.constant 0 : i32
    %c0_i32_0 = arith.constant 0 : i32
    %c0_i32_1 = arith.constant 0 : i32
    return %arg0, %c0_i32, %c0_i32_0 : i32, i32, i32
  }
}

</mosaic_0001>

<llo_original>
// kernel: tpu_custom_call.1
$region0: #{tpu_custom_call.1}
  #allocation0 [shape = 'u32[]', space=smem, size = 0x4, offset = 0x4, fixed_abs, tag = 'smem constant byte address 0x4 - core index']
  #allocation1 [shape = 'u32[144,128]{1,0:T(1,128)}', space=vmem, size = 0x12000, scoped, tag = 'internal scratch']
  #allocation2 [shape = 'f32[36,256]{1,0:T(8,128)}', space=vmem, size = 0xa000, scoped, tag = 'scratch operand']
  %s0 = inlined_call_operand.hbm [shape: f32[2,4,256], index: 0, kind: input, shape index: {}]
  %s1 = inlined_call_operand.vmem [shape: bf16[4,36], index: 1, kind: input, shape index: {}]
  %s2 = inlined_call_operand.vmem [shape: f32[4,1], index: 2, kind: input, shape index: {}]
  %s3 = inlined_call_operand.vmem [shape: bf16[4,36], index: 3, kind: input, shape index: {}]
  %s4 = inlined_call_operand.vmem [shape: f32[4,1], index: 4, kind: input, shape index: {}]
  %s5 = inlined_call_operand.hbm [shape: f32[2,4,256], index: 5, kind: output, shape index: {}]
  %s6 = sld [smem:[#allocation0]]
  $region57: #{tpu_custom_call.1} parent=0
    _
  %s8 = ssub.s32 1, %s6
  %s9 = scalar_select 0, %s8, %s6
  $region1: #{tpu_custom_call.1} parent=0
    #allocation3 [shape = 'u8[8192]{0}', space=vmem, size = 0x2000, scoped, tag = 'input window, operand 0']
    #allocation4 [shape = 's32[2]{0}', space=sflag, size = 0x8, scoped, tag = 'scoped memory for tpu_custom_call.1']
    #allocation5 [shape = 's32[2]{0}', space=sflag, size = 0x8, scoped, tag = 'scoped memory for tpu_custom_call.1']
    #allocation6 [shape = 'u8[8192]{0}', space=vmem, size = 0x2000, scoped, tag = 'output window, operand 0']
    %10 = vsyncpa [#allocation4], 0
    %s11 = scalar_lea.sflag [#allocation4], 1
    %12 = vsyncpa %s11, 0
    %13 = vsyncpa [#allocation5], 0
    %s14 = scalar_lea.sflag [#allocation5], 1
    %15 = vsyncpa %s14, 0
    loop: start=0, step=1, limit=4
    $region2: #{tpu_custom_call.1} parent=1 // loop_pre_header
      _
    $region3: #{tpu_custom_call.1} parent=1 // loop_header
      %s17 = sphi 0, %s21
      %p18 = scmp.ge.s32.totalorder %s17, 4
      %s27 = sphi 0, %s29
      %s30 = sphi 0, %s27
      %s31 = sphi 0, %s30
      %s47 = sphi 0, %s31
      %s51 = sphi 0, %s51
      %s53 = sphi 0, %s51
      %s54 = sphi 0, %s53
      %s68 = sphi 0, %s54
      %s72 = sphi 0, %s72
      %s74 = sphi 0, %s72
      %s75 = sphi 0, %s74
      %s89 = sphi 0, %s75
      %s93 = sphi 0, %s93
      %s95 = sphi 0, %s93
      %s96 = sphi 0, %s95
      %s110 = sphi 0, %s96
      %s114 = sphi 0, %s114
      %s116 = sphi 0, %s114
      %s117 = sphi 0, %s116
      %s131 = sphi 0, %s117
      %s137 = sphi 0, %s139
      %s140 = sphi 0, %s137
      %s141 = sphi 0, %s140
      %s157 = sphi 0, %s141
    $region4: #{tpu_custom_call.1} parent=1 // loop_header_branch
      %20 = sbr.rel (%p18) target = $region8
    $region5: #{tpu_custom_call.1} parent=1 // loop_body
      %s22 = ssub.s32 %s17, 1
      %s23 = ssub.s32 %s17, 2
      %s24 = sadd.s32 %s17, 1
      %s25 = ssub.s32 %s17, %s24
      %p26 = scmp.eq.s32.totalorder %s25, 0
      %s28 = sadd.s32 %s27, 1
      %s29 = scalar_select %p26, %s27, %s28
      %p32 = pneg %p26
      %p33 = scmp.eq.s32.totalorder %s17, 1
      %p34 = por %p32, %p33
      %p35 = scmp.ne.s32.totalorder %s27, %s30
      %p36 = scmp.eq.s32.totalorder %s17, 0
      %p37 = por %p35, %p36
      %p38 = scmp.ne.s32.totalorder %s27, %s30
      %p39 = scmp.eq.s32.totalorder %s22, 1
      %p40 = por %p38, %p39
      %p41 = scmp.ne.s32.totalorder %s30, %s31
      %p42 = scmp.eq.s32.totalorder %s22, 0
      %p43 = por %p41, %p42
      %p44 = scmp.ne.s32.totalorder %s30, %s31
      %p45 = scmp.eq.s32.totalorder %s23, 1
      %p46 = por %p44, %p45
      %p48 = scmp.ne.s32.totalorder %s31, %s47
      %p49 = scmp.eq.s32.totalorder %s23, 0
      %p50 = por %p48, %p49
      %s52 = sadd.s32 %s51, 1
      %p55 = scmp.eq.s32.totalorder %s17, 1
      %p56 = scmp.ne.s32.totalorder %s51, %s53
      %p57 = scmp.eq.s32.totalorder %s17, 0
      %p58 = por %p56, %p57
      %p59 = scmp.ne.s32.totalorder %s51, %s53
      %p60 = scmp.eq.s32.totalorder %s22, 1
      %p61 = por %p59, %p60
      %p62 = scmp.ne.s32.totalorder %s53, %s54
      %p63 = scmp.eq.s32.totalorder %s22, 0
      %p64 = por %p62, %p63
      %p65 = scmp.ne.s32.totalorder %s53, %s54
      %p66 = scmp.eq.s32.totalorder %s23, 1
      %p67 = por %p65, %p66
      %p69 = scmp.ne.s32.totalorder %s54, %s68
      %p70 = scmp.eq.s32.totalorder %s23, 0
      %p71 = por %p69, %p70
      %s73 = sadd.s32 %s72, 1
      %p76 = scmp.eq.s32.totalorder %s17, 1
      %p77 = scmp.ne.s32.totalorder %s72, %s74
      %p78 = scmp.eq.s32.totalorder %s17, 0
      %p79 = por %p77, %p78
      %p80 = scmp.ne.s32.totalorder %s72, %s74
      %p81 = scmp.eq.s32.totalorder %s22, 1
      %p82 = por %p80, %p81
      %p83 = scmp.ne.s32.totalorder %s74, %s75
      %p84 = scmp.eq.s32.totalorder %s22, 0
      %p85 = por %p83, %p84
      %p86 = scmp.ne.s32.totalorder %s74, %s75
      %p87 = scmp.eq.s32.totalorder %s23, 1
      %p88 = por %p86, %p87
      %p90 = scmp.ne.s32.totalorder %s75, %s89
      %p91 = scmp.eq.s32.totalorder %s23, 0
      %p92 = por %p90, %p91
      %s94 = sadd.s32 %s93, 1
      %p97 = scmp.eq.s32.totalorder %s17, 1
      %p98 = scmp.ne.s32.totalorder %s93, %s95
      %p99 = scmp.eq.s32.totalorder %s17, 0
      %p100 = por %p98, %p99
      %p101 = scmp.ne.s32.totalorder %s93, %s95
      %p102 = scmp.eq.s32.totalorder %s22, 1
      %p103 = por %p101, %p102
      %p104 = scmp.ne.s32.totalorder %s95, %s96
      %p105 = scmp.eq.s32.totalorder %s22, 0
      %p106 = por %p104, %p105
      %p107 = scmp.ne.s32.totalorder %s95, %s96
      %p108 = scmp.eq.s32.totalorder %s23, 1
      %p109 = por %p107, %p108
      %p111 = scmp.ne.s32.totalorder %s96, %s110
      %p112 = scmp.eq.s32.totalorder %s23, 0
      %p113 = por %p111, %p112
      %s115 = sadd.s32 %s114, 1
      %p118 = scmp.eq.s32.totalorder %s17, 1
      %p119 = scmp.ne.s32.totalorder %s114, %s116
      %p120 = scmp.eq.s32.totalorder %s17, 0
      %p121 = por %p119, %p120
      %p122 = scmp.ne.s32.totalorder %s114, %s116
      %p123 = scmp.eq.s32.totalorder %s22, 1
      %p124 = por %p122, %p123
      %p125 = scmp.ne.s32.totalorder %s116, %s117
      %p126 = scmp.eq.s32.totalorder %s22, 0
      %p127 = por %p125, %p126
      %p128 = scmp.ne.s32.totalorder %s116, %s117
      %p129 = scmp.eq.s32.totalorder %s23, 1
      %p130 = por %p128, %p129
      %p132 = scmp.ne.s32.totalorder %s117, %s131
      %p133 = scmp.eq.s32.totalorder %s23, 0
      %p134 = por %p132, %p133
      %s135 = ssub.s32 %s17, %s24
      %p136 = scmp.eq.s32.totalorder %s135, 0
      %s138 = sadd.s32 %s137, 1
      %s139 = scalar_select %p136, %s137, %s138
      %p142 = pneg %p136
      %p143 = scmp.eq.s32.totalorder %s17, 1
      %p144 = por %p142, %p143
      %p145 = scmp.ne.s32.totalorder %s137, %s140
      %p146 = scmp.eq.s32.totalorder %s17, 0
      %p147 = por %p145, %p146
      %p148 = scmp.ne.s32.totalorder %s137, %s140
      %p149 = scmp.eq.s32.totalorder %s22, 1
      %p150 = por %p148, %p149
      %p151 = scmp.ne.s32.totalorder %s140, %s141
      %p152 = scmp.eq.s32.totalorder %s22, 0
      %p153 = por %p151, %p152
      %p154 = scmp.ne.s32.totalorder %s140, %s141
      %p155 = scmp.eq.s32.totalorder %s23, 1
      %p156 = por %p154, %p155
      %p158 = scmp.ne.s32.totalorder %s141, %s157
      %p159 = scmp.eq.s32.totalorder %s23, 0
      %p160 = por %p158, %p159
      %p161 = scmp.le.s32.totalorder 1, %s17
      %p162 = scmp.lt.s32.totalorder %s17, 3
      %p163 = pnand %p161, %p162
      %p164 = pneg %p163
      // Predicated region
      $region9: #{tpu_custom_call.1} parent=5 // pred_check
        _
      $region10: #{tpu_custom_call.1} parent=5 // pred_check_branch
        %166 = sbr.rel (%p163) target = $region12
      $region11: #{tpu_custom_call.1} parent=5 // pred_region
        %s167 = ssub.s32 %s17, 1
        // Predicated region
        $region13: #{tpu_custom_call.1} parent=11 // pred_check
          %p168 = pneg %p64
        $region14: #{tpu_custom_call.1} parent=11 // pred_check_branch
          %170 = sbr.rel (%p168) target = $region16
        $region15: #{tpu_custom_call.1} parent=11 // pred_region
          _
        $region16: #{tpu_custom_call.1} parent=11 // pred_fallthru
          _
        // Predicated region
        $region17: #{tpu_custom_call.1} parent=11 // pred_check
          %p171 = pneg %p85
        $region18: #{tpu_custom_call.1} parent=11 // pred_check_branch
          %173 = sbr.rel (%p171) target = $region20
        $region19: #{tpu_custom_call.1} parent=11 // pred_region
          _
        $region20: #{tpu_custom_call.1} parent=11 // pred_fallthru
          _
        // Predicated region
        $region21: #{tpu_custom_call.1} parent=11 // pred_check
          %p174 = pneg %p106
        $region22: #{tpu_custom_call.1} parent=11 // pred_check_branch
          %176 = sbr.rel (%p174) target = $region24
        $region23: #{tpu_custom_call.1} parent=11 // pred_region
          _
        $region24: #{tpu_custom_call.1} parent=11 // pred_fallthru
          _
        // Predicated region
        $region25: #{tpu_custom_call.1} parent=11 // pred_check
          %p177 = pneg %p127
        $region26: #{tpu_custom_call.1} parent=11 // pred_check_branch
          %179 = sbr.rel (%p177) target = $region28
        $region27: #{tpu_custom_call.1} parent=11 // pred_region
          _
        $region28: #{tpu_custom_call.1} parent=11 // pred_fallthru
          _
      $region12: #{tpu_custom_call.1} parent=5 // pred_fallthru
        _
      %p180 = scmp.lt.s32.totalorder %s17, 2
      // Predicated region
      $region29: #{tpu_custom_call.1} parent=5 // pred_check
        %p181 = pneg %p180
      $region30: #{tpu_custom_call.1} parent=5 // pred_check_branch
        %183 = sbr.rel (%p181) target = $region32
      $region31: #{tpu_custom_call.1} parent=5 // pred_region
        // Predicated region
        $region33: #{tpu_custom_call.1} parent=31 // pred_check
          %p184 = pneg %p37
        $region34: #{tpu_custom_call.1} parent=31 // pred_check_branch
          %186 = sbr.rel (%p184) target = $region36
        $region35: #{tpu_custom_call.1} parent=31 // pred_region
          %s187 = sand.u32 %s27, 1
          %s188 = scalar_lea.sflag [#allocation4], %s187
          %s189 = sand.u32 %s27, 1
          %s190 = smul.addr %s189, 8
          %s191 = scalar_lea.vmem [#allocation3], %s190
          %s193 = ssub.s32 128, 128
          %194 = vsyncadd %s188, %s193
          %s195 = smul.addr %s17, 2
          %s196 = smul.addr %s195, 64
          %s197 = scalar_lea.hbm %s0, %s196
          %s199 = sshll.u32 %s191, 4
          %s200 = int_to_ptr.vmem [resolvable:$true] %s199
          %202 = dma.hbm_to_vmem [thread:$0]  %s197, 128, %s200, %s188
        $region36: #{tpu_custom_call.1} parent=31 // pred_fallthru
          _
      $region32: #{tpu_custom_call.1} parent=5 // pred_fallthru
        _
      %p203 = scmp.le.s32.totalorder 1, %s17
      %p204 = scmp.lt.s32.totalorder %s17, 3
      %p205 = pnand %p203, %p204
      %p206 = pneg %p205
      // Predicated region
      $region37: #{tpu_custom_call.1} parent=5 // pred_check
        _
      $region38: #{tpu_custom_call.1} parent=5 // pred_check_branch
        %208 = sbr.rel (%p205) target = $region40
      $region39: #{tpu_custom_call.1} parent=5 // pred_region
        %s209 = ssub.s32 %s17, 1
        %s210 = sand.u32 %s30, 1
        %s211 = scalar_lea.sflag [#allocation4], %s210
        %s212 = sand.u32 %s30, 1
        %s213 = smul.addr %s212, 8
        %s214 = scalar_lea.vmem [#allocation3], %s213
        // Predicated region
        $region41: #{tpu_custom_call.1} parent=39 // pred_check
          %p215 = pneg %p43
        $region42: #{tpu_custom_call.1} parent=39 // pred_check_branch
          %217 = sbr.rel (%p215) target = $region44
        $region43: #{tpu_custom_call.1} parent=39 // pred_region
          %218 = dma.done %s211, 128
        $region44: #{tpu_custom_call.1} parent=39 // pred_fallthru
          _
        %s219 = sand.u32 %s30, 1
        %s220 = scalar_lea.sflag [#allocation4], %s219
        %s221 = sand.u32 %s30, 1
        %s222 = smul.addr %s221, 8
        %s223 = scalar_lea.vmem [#allocation3], %s222
        %p224 = pneg %p43
        %p225 = pneg %p40
        %p226 = pneg %p64
        %p227 = pneg %p61
        %p228 = pneg %p85
        %p229 = pneg %p82
        %p230 = pneg %p106
        %p231 = pneg %p103
        %p232 = pneg %p127
        %p233 = pneg %p124
        %p234 = pneg %p153
        %p235 = pneg %p150
        %s236 = sand.u32 %s140, 1
        %s237 = scalar_lea.sflag [#allocation5], %s236
        %s238 = sand.u32 %s140, 1
        %s239 = smul.addr %s238, 8
        %s240 = scalar_lea.vmem [#allocation6], %s239
        %v242 = vld [vmem:[%s214] sm:$0xff]
        %v243 = vlaneseq
        %v244 = vand.u32 %v243, 127
        %v245 = vadd.s32 %v244, 128
        %v246 = vand.u32 %v244, 255
        %v247 = vand.u32 %v245, 255
        %v248 = vshra.s32 %v246, 4
        %v249 = vshra.s32 %v247, 4
        %v250 = vand.u32 %v246, 15
        %v251 = vand.u32 %v247, 15
        %vm252 = vcmp.ge.s32.totalorder %v248, 1
        %vm253 = vcmp.ge.s32.totalorder %v249, 1
        %vm254 = vcmp.le.s32.totalorder %v248, 14
        %vm255 = vcmp.le.s32.totalorder %v249, 14
        %vm256 = vcmp.ge.s32.totalorder %v250, 1
        %vm257 = vcmp.ge.s32.totalorder %v251, 1
        %vm258 = vcmp.le.s32.totalorder %v250, 14
        %vm259 = vcmp.le.s32.totalorder %v251, 14
        %vm260 = vmand %vm252, %vm256
        %vm261 = vmand %vm253, %vm257
        %vm262 = vmand %vm252, %vm258
        %vm263 = vmand %vm253, %vm259
        %vm264 = vmand %vm254, %vm256
        %vm265 = vmand %vm255, %vm257
        %vm266 = vmand %vm254, %vm258
        %vm267 = vmand %vm255, %vm259
        %v269 = vcombine.high %v242, %v242
        %271 = vrot.lane.b32.xlu0 %v242, 17
        %v272 = vpop.permute.xlu0 %271
        %273 = vrot.lane.b32.xlu0 %v269, 17
        %v274 = vpop.permute.xlu0 %273
        %vm275 = vcmp.lt.s32.totalorder %v244, 17
        %v276 = vsel %vm275, %v272, %v274
        %v277 = vsel %vm275, %v274, %v272
        %v278 = vsel %vm260, %v277, 0.0
        %v279 = vsel %vm261, %v276, 0.0
        %280 = vst [vmem:[#allocation2] sm:$0xf] %v278
        %281 = vst [vmem:[#allocation2 + $0x8] sm:$0xf] %v279
        %282 = vrot.lane.b32.xlu0 %v242, 16
        %v283 = vpop.permute.xlu0 %282
        %284 = vrot.lane.b32.xlu0 %v269, 16
        %v285 = vpop.permute.xlu0 %284
        %vm286 = vcmp.lt.s32.totalorder %v244, 16
        %v287 = vsel %vm286, %v283, %v285
        %v288 = vsel %vm286, %v285, %v283
        %v289 = vsel %vm252, %v288, 0.0
        %v290 = vsel %vm253, %v287, 0.0
        %v293 = vrot.slane %v289, 4
        %v294 = vrot.slane %v290, 4
        %297 = vst [vmem:[#allocation2] sm:$0xf0] %v293
        %298 = vst [vmem:[#allocation2 + $0x8] sm:$0xf0] %v294
        %299 = vrot.lane.b32.xlu0 %v242, 15
        %v300 = vpop.permute.xlu0 %299
        %301 = vrot.lane.b32.xlu0 %v269, 15
        %v302 = vpop.permute.xlu0 %301
        %vm303 = vcmp.lt.s32.totalorder %v244, 15
        %v304 = vsel %vm303, %v300, %v302
        %v305 = vsel %vm303, %v302, %v300
        %v306 = vsel %vm262, %v305, 0.0
        %v307 = vsel %vm263, %v304, 0.0
        %308 = vst [vmem:[#allocation2 + $0x10] sm:$0xf] %v306
        %309 = vst [vmem:[#allocation2 + $0x18] sm:$0xf] %v307
        %310 = vrot.lane.b32.xlu0 %v242, 1
        %v311 = vpop.permute.xlu0 %310
        %312 = vrot.lane.b32.xlu0 %v269, 1
        %v313 = vpop.permute.xlu0 %312
        %vm314 = vcmp.lt.s32.totalorder %v244, 1
        %v315 = vsel %vm314, %v311, %v313
        %v316 = vsel %vm314, %v313, %v311
        %v317 = vsel %vm256, %v316, 0.0
        %v318 = vsel %vm257, %v315, 0.0
        %v321 = vrot.slane %v317, 4
        %v322 = vrot.slane %v318, 4
        %325 = vst [vmem:[#allocation2 + $0x10] sm:$0xf0] %v321
        %326 = vst [vmem:[#allocation2 + $0x18] sm:$0xf0] %v322
        %327 = vst [vmem:[#allocation2 + $0x20] sm:$0xf] %v242
        %328 = vst [vmem:[#allocation2 + $0x28] sm:$0xf] %v269
        %329 = vrot.lane.b32.xlu0 %v242, 127
        %v330 = vpop.permute.xlu0 %329
        %331 = vrot.lane.b32.xlu0 %v269, 127
        %v332 = vpop.permute.xlu0 %331
        %vm333 = vcmp.lt.s32.totalorder %v244, 127
        %v334 = vsel %vm333, %v330, %v332
        %v335 = vsel %vm333, %v332, %v330
        %v336 = vsel %vm258, %v334, 0.0
        %v337 = vsel %vm259, %v335, 0.0
        %v340 = vrot.slane %v336, 4
        %v341 = vrot.slane %v337, 4
        %344 = vst [vmem:[#allocation2 + $0x20] sm:$0xf0] %v340
        %345 = vst [vmem:[#allocation2 + $0x28] sm:$0xf0] %v341
        %346 = vrot.lane.b32.xlu0 %v242, 113
        %v347 = vpop.permute.xlu0 %346
        %348 = vrot.lane.b32.xlu0 %v269, 113
        %v349 = vpop.permute.xlu0 %348
        %vm350 = vcmp.lt.s32.totalorder %v244, 113
        %v351 = vsel %vm350, %v347, %v349
        %v352 = vsel %vm350, %v349, %v347
        %v353 = vsel %vm264, %v351, 0.0
        %v354 = vsel %vm265, %v352, 0.0
        %355 = vst [vmem:[#allocation2 + $0x30] sm:$0xf] %v353
        %356 = vst [vmem:[#allocation2 + $0x38] sm:$0xf] %v354
        %357 = vrot.lane.b32.xlu0 %v242, 112
        %v358 = vpop.permute.xlu0 %357
        %359 = vrot.lane.b32.xlu0 %v269, 112
        %v360 = vpop.permute.xlu0 %359
        %vm361 = vcmp.lt.s32.totalorder %v244, 112
        %v362 = vsel %vm361, %v358, %v360
        %v363 = vsel %vm361, %v360, %v358
        %v364 = vsel %vm254, %v362, 0.0
        %v365 = vsel %vm255, %v363, 0.0
        %v368 = vrot.slane %v364, 4
        %v369 = vrot.slane %v365, 4
        %372 = vst [vmem:[#allocation2 + $0x30] sm:$0xf0] %v368
        %373 = vst [vmem:[#allocation2 + $0x38] sm:$0xf0] %v369
        %374 = vrot.lane.b32.xlu0 %v242, 111
        %v375 = vpop.permute.xlu0 %374
        %376 = vrot.lane.b32.xlu0 %v269, 111
        %v377 = vpop.permute.xlu0 %376
        %vm378 = vcmp.lt.s32.totalorder %v244, 111
        %v379 = vsel %vm378, %v375, %v377
        %v380 = vsel %vm378, %v377, %v375
        %v381 = vsel %vm266, %v379, 0.0
        %v382 = vsel %vm267, %v380, 0.0
        %383 = vst [vmem:[#allocation2 + $0x40] sm:$0xf] %v381
        %384 = vst [vmem:[#allocation2 + $0x48] sm:$0xf] %v382
        %v385 = vld [vmem:[%s1] sm:$0x3]
        %v386 = vld [vmem:[#allocation2] sm:$0xff]
        %v387 = vld [vmem:[#allocation2 + $0x8] sm:$0xff]
        %v388 = vld [vmem:[#allocation2 + $0x10] sm:$0xff]
        %v389 = vld [vmem:[#allocation2 + $0x18] sm:$0xff]
        %v390 = vld [vmem:[#allocation2 + $0x20] sm:$0xff]
        %v391 = vld [vmem:[#allocation2 + $0x28] sm:$0xff]
        %v392 = vld [vmem:[#allocation2 + $0x30] sm:$0xff]
        %v393 = vld [vmem:[#allocation2 + $0x38] sm:$0xff]
        %v394 = vld [vmem:[#allocation2 + $0x40] sm:$0xf]
        %v395 = vld [vmem:[#allocation2 + $0x48] sm:$0xf]
        %v396 = vpack.c.bf16 %v388, %v386
        %v397 = vpack.c.bf16 %v389, %v387
        %v398 = vpack.c.bf16 %v392, %v390
        %v399 = vpack.c.bf16 %v393, %v391
        %v400 = vpack.c.bf16 %v394, %v394
        %v401 = vpack.c.bf16 %v395, %v395
        %v402 = vld [vmem:[%s2] sm:$0xf]
        %404 = vset.pattern.permute.xlu0 0
        %405 = vperm.xlu0 %404, %v402
        %v406 = vpop.permute.xlu0 %405
        %vm408 = vcmask 293888
        %v410 = vsel %vm408, %v385, 0
        %vm412 = vcmask 1041408
        %v414 = vsel %vm412, %v400, 0
        %v417 = vsel %vm412, %v401, 0
        %419 = vmatprep.subr.bf16.mxu0 %v397
        %420 = vmatpush1.bf16.msra.mxu0 %v396
        %421 = vmatprep.subr.bf16.mxu0 %v399
        %422 = vmatpush1.bf16.msra.mxu0 %v398
        %423 = vmatprep.subr.bf16.mxu0 %v417
        %424 = vmatpush1.bf16.msra.mxu0 %v414
        %425 = vmatprep.subr.bf16.mxu0 0
        %426 = vmatpush1.bf16.msra.mxu0 0
        %427 = vmatprep.subr.bf16.mxu0 0
        %428 = vmatpush1.bf16.msra.mxu0 0
        %429 = vmatprep.subr.bf16.mxu0 0
        %430 = vmatpush1.bf16.msra.mxu0 0
        %431 = vmatprep.subr.bf16.mxu0 0
        %432 = vmatpush1.bf16.msra.mxu0 0
        %433 = vmatprep.subr.bf16.mxu0 0
        %434 = vmatpush1.bf16.msra.mxu0 0
        %435 = vmatprep.subr.bf16.mxu0 0
        %436 = vmatpush1.bf16.msra.mxu0 0
        %437 = vmatprep.subr.bf16.mxu0 0
        %438 = vmatpush1.bf16.msra.mxu0 0
        %439 = vmatprep.subr.bf16.mxu0 0
        %440 = vmatpush1.bf16.msra.mxu0 0
        %441 = vmatprep.subr.bf16.mxu0 0
        %442 = vmatpush1.bf16.msra.mxu0 0
        %443 = vmatprep.subr.bf16.mxu0 0
        %444 = vmatpush1.bf16.msra.mxu0 0
        %445 = vmatprep.subr.bf16.mxu0 0
        %446 = vmatpush1.bf16.msra.mxu0 0
        %447 = vmatprep.subr.bf16.mxu0 0
        %448 = vmatpush1.bf16.msra.mxu0 0
        %449 = vmatprep.subr.bf16.mxu0 0
        %450 = vmatpush1.bf16.msra.mxu0 0
        %451 = vmatprep.mubr.bf16.mxu0 0
        %452 = vmatmul.mubr.bf16.gmra.mrb[0].mxu0 %v410
        %v453 = vpop.f32.mrb[0].mxu0
        %v454 = vadd.f32 %v406, %v453
        %v455 = vpop.f32.mrb[0].mxu0
        %v456 = vadd.f32 %v406, %v455
        %v457 = vpop.f32.mrb[0].mxu0
        %v458 = vpop.f32.mrb[0].mxu0
        %459 = vdwg.mxu0
        %v460 = vmax.f32 %v454, 0.0
        %v461 = vmax.f32 %v456, 0.0
        %462 = vrot.lane.b32.xlu0 %v460, 17
        %v463 = vpop.permute.xlu0 %462
        %464 = vrot.lane.b32.xlu0 %v461, 17
        %v465 = vpop.permute.xlu0 %464
        %v466 = vsel %vm275, %v463, %v465
        %v467 = vsel %vm275, %v465, %v463
        %v468 = vsel %vm260, %v467, 0.0
        %v469 = vsel %vm261, %v466, 0.0
        %470 = vst [vmem:[#allocation2] sm:$0xf] %v468
        %471 = vst [vmem:[#allocation2 + $0x8] sm:$0xf] %v469
        %472 = vrot.lane.b32.xlu0 %v460, 16
        %v473 = vpop.permute.xlu0 %472
        %474 = vrot.lane.b32.xlu0 %v461, 16
        %v475 = vpop.permute.xlu0 %474
        %v476 = vsel %vm286, %v473, %v475
        %v477 = vsel %vm286, %v475, %v473
        %v478 = vsel %vm252, %v477, 0.0
        %v479 = vsel %vm253, %v476, 0.0
        %v482 = vrot.slane %v478, 4
        %v483 = vrot.slane %v479, 4
        %486 = vst [vmem:[#allocation2] sm:$0xf0] %v482
        %487 = vst [vmem:[#allocation2 + $0x8] sm:$0xf0] %v483
        %488 = vrot.lane.b32.xlu0 %v460, 15
        %v489 = vpop.permute.xlu0 %488
        %490 = vrot.lane.b32.xlu0 %v461, 15
        %v491 = vpop.permute.xlu0 %490
        %v492 = vsel %vm303, %v489, %v491
        %v493 = vsel %vm303, %v491, %v489
        %v494 = vsel %vm262, %v493, 0.0
        %v495 = vsel %vm263, %v492, 0.0
        %496 = vst [vmem:[#allocation2 + $0x10] sm:$0xf] %v494
        %497 = vst [vmem:[#allocation2 + $0x18] sm:$0xf] %v495
        %498 = vrot.lane.b32.xlu0 %v460, 1
        %v499 = vpop.permute.xlu0 %498
        %500 = vrot.lane.b32.xlu0 %v461, 1
        %v501 = vpop.permute.xlu0 %500
        %v502 = vsel %vm314, %v499, %v501
        %v503 = vsel %vm314, %v501, %v499
        %v504 = vsel %vm256, %v503, 0.0
        %v505 = vsel %vm257, %v502, 0.0
        %v508 = vrot.slane %v504, 4
        %v509 = vrot.slane %v505, 4
        %512 = vst [vmem:[#allocation2 + $0x10] sm:$0xf0] %v508
        %513 = vst [vmem:[#allocation2 + $0x18] sm:$0xf0] %v509
        %514 = vst [vmem:[#allocation2 + $0x20] sm:$0xf] %v460
        %515 = vst [vmem:[#allocation2 + $0x28] sm:$0xf] %v461
        %516 = vrot.lane.b32.xlu0 %v460, 127
        %v517 = vpop.permute.xlu0 %516
        %518 = vrot.lane.b32.xlu0 %v461, 127
        %v519 = vpop.permute.xlu0 %518
        %v520 = vsel %vm333, %v517, %v519
        %v521 = vsel %vm333, %v519, %v517
        %v522 = vsel %vm258, %v520, 0.0
        %v523 = vsel %vm259, %v521, 0.0
        %v526 = vrot.slane %v522, 4
        %v527 = vrot.slane %v523, 4
        %530 = vst [vmem:[#allocation2 + $0x20] sm:$0xf0] %v526
        %531 = vst [vmem:[#allocation2 + $0x28] sm:$0xf0] %v527
        %532 = vrot.lane.b32.xlu0 %v460, 113
        %v533 = vpop.permute.xlu0 %532
        %534 = vrot.lane.b32.xlu0 %v461, 113
        %v535 = vpop.permute.xlu0 %534
        %v536 = vsel %vm350, %v533, %v535
        %v537 = vsel %vm350, %v535, %v533
        %v538 = vsel %vm264, %v536, 0.0
        %v539 = vsel %vm265, %v537, 0.0
        %540 = vst [vmem:[#allocation2 + $0x30] sm:$0xf] %v538
        %541 = vst [vmem:[#allocation2 + $0x38] sm:$0xf] %v539
        %542 = vrot.lane.b32.xlu0 %v460, 112
        %v543 = vpop.permute.xlu0 %542
        %544 = vrot.lane.b32.xlu0 %v461, 112
        %v545 = vpop.permute.xlu0 %544
        %v546 = vsel %vm361, %v543, %v545
        %v547 = vsel %vm361, %v545, %v543
        %v548 = vsel %vm254, %v546, 0.0
        %v549 = vsel %vm255, %v547, 0.0
        %v552 = vrot.slane %v548, 4
        %v553 = vrot.slane %v549, 4
        %556 = vst [vmem:[#allocation2 + $0x30] sm:$0xf0] %v552
        %557 = vst [vmem:[#allocation2 + $0x38] sm:$0xf0] %v553
        %558 = vrot.lane.b32.xlu0 %v460, 111
        %v559 = vpop.permute.xlu0 %558
        %560 = vrot.lane.b32.xlu0 %v461, 111
        %v561 = vpop.permute.xlu0 %560
        %v562 = vsel %vm378, %v559, %v561
        %v563 = vsel %vm378, %v561, %v559
        %v564 = vsel %vm266, %v562, 0.0
        %v565 = vsel %vm267, %v563, 0.0
        %566 = vst [vmem:[#allocation2 + $0x40] sm:$0xf] %v564
        %567 = vst [vmem:[#allocation2 + $0x48] sm:$0xf] %v565
        %v568 = vld [vmem:[%s3] sm:$0x3]
        %v569 = vld [vmem:[#allocation2] sm:$0xff]
        %v570 = vld [vmem:[#allocation2 + $0x8] sm:$0xff]
        %v571 = vld [vmem:[#allocation2 + $0x10] sm:$0xff]
        %v572 = vld [vmem:[#allocation2 + $0x18] sm:$0xff]
        %v573 = vld [vmem:[#allocation2 + $0x20] sm:$0xff]
        %v574 = vld [vmem:[#allocation2 + $0x28] sm:$0xff]
        %v575 = vld [vmem:[#allocation2 + $0x30] sm:$0xff]
        %v576 = vld [vmem:[#allocation2 + $0x38] sm:$0xff]
        %v577 = vld [vmem:[#allocation2 + $0x40] sm:$0xf]
        %v578 = vld [vmem:[#allocation2 + $0x48] sm:$0xf]
        %v579 = vpack.c.bf16 %v571, %v569
        %v580 = vpack.c.bf16 %v572, %v570
        %v581 = vpack.c.bf16 %v575, %v573
        %v582 = vpack.c.bf16 %v576, %v574
        %v583 = vpack.c.bf16 %v577, %v577
        %v584 = vpack.c.bf16 %v578, %v578
        %v585 = vld [vmem:[%s4] sm:$0xf]
        %587 = vset.pattern.permute.xlu0 0
        %588 = vperm.xlu0 %587, %v585
        %v589 = vpop.permute.xlu0 %588
        %v592 = vsel %vm408, %v568, 0
        %v595 = vsel %vm412, %v583, 0
        %v598 = vsel %vm412, %v584, 0
        %600 = vmatprep.subr.bf16.mxu0 %v580
        %601 = vmatpush1.bf16.msra.mxu0 %v579
        %602 = vmatprep.subr.bf16.mxu0 %v582
        %603 = vmatpush1.bf16.msra.mxu0 %v581
        %604 = vmatprep.subr.bf16.mxu0 %v598
        %605 = vmatpush1.bf16.msra.mxu0 %v595
        %606 = vmatprep.subr.bf16.mxu0 0
        %607 = vmatpush1.bf16.msra.mxu0 0
        %608 = vmatprep.subr.bf16.mxu0 0
        %609 = vmatpush1.bf16.msra.mxu0 0
        %610 = vmatprep.subr.bf16.mxu0 0
        %611 = vmatpush1.bf16.msra.mxu0 0
        %612 = vmatprep.subr.bf16.mxu0 0
        %613 = vmatpush1.bf16.msra.mxu0 0
        %614 = vmatprep.subr.bf16.mxu0 0
        %615 = vmatpush1.bf16.msra.mxu0 0
        %616 = vmatprep.subr.bf16.mxu0 0
        %617 = vmatpush1.bf16.msra.mxu0 0
        %618 = vmatprep.subr.bf16.mxu0 0
        %619 = vmatpush1.bf16.msra.mxu0 0
        %620 = vmatprep.subr.bf16.mxu0 0
        %621 = vmatpush1.bf16.msra.mxu0 0
        %622 = vmatprep.subr.bf16.mxu0 0
        %623 = vmatpush1.bf16.msra.mxu0 0
        %624 = vmatprep.subr.bf16.mxu0 0
        %625 = vmatpush1.bf16.msra.mxu0 0
        %626 = vmatprep.subr.bf16.mxu0 0
        %627 = vmatpush1.bf16.msra.mxu0 0
        %628 = vmatprep.subr.bf16.mxu0 0
        %629 = vmatpush1.bf16.msra.mxu0 0
        %630 = vmatprep.subr.bf16.mxu0 0
        %631 = vmatpush1.bf16.msra.mxu0 0
        %632 = vmatprep.mubr.bf16.mxu0 0
        %633 = vmatmul.mubr.bf16.gmra.mrb[0].mxu0 %v592
        %v634 = vpop.f32.mrb[0].mxu0
        %v635 = vadd.f32 %v589, %v634
        %v636 = vpop.f32.mrb[0].mxu0
        %v637 = vadd.f32 %v589, %v636
        %v638 = vpop.f32.mrb[0].mxu0
        %v639 = vpop.f32.mrb[0].mxu0
        %640 = vdwg.mxu0
        %v643 = vcombine.low %v635, %v637
        %v645 = vadd.f32 %v242, %v643
        %646 = vst [vmem:[%s240] sm:$0xff] %v645
        %s647 = sand.u32 %s140, 1
        %s648 = scalar_lea.sflag [#allocation5], %s647
        %s649 = sand.u32 %s140, 1
        %s650 = smul.addr %s649, 8
        %s651 = scalar_lea.vmem [#allocation6], %s650
        // Predicated region
        $region45: #{tpu_custom_call.1} parent=39 // pred_check
          %p652 = pneg %p150
        $region46: #{tpu_custom_call.1} parent=39 // pred_check_branch
          %654 = sbr.rel (%p652) target = $region48
        $region47: #{tpu_custom_call.1} parent=39 // pred_region
          %s656 = ssub.s32 128, 128
          %657 = vsyncadd %s648, %s656
          %s658 = smul.addr %s22, 2
          %s659 = smul.addr %s658, 64
          %s660 = scalar_lea.hbm %s5, %s659
          %s662 = sshll.u32 %s651, 4
          %s663 = int_to_ptr.vmem [resolvable:$true] %s662
          %665 = dma.vmem_to_hbm [thread:$0]  %s663, 128, %s660, %s648
        $region48: #{tpu_custom_call.1} parent=39 // pred_fallthru
          _
      $region40: #{tpu_custom_call.1} parent=5 // pred_fallthru
        _
      %p666 = scmp.le.s32.totalorder 2, %s17
      // Predicated region
      $region49: #{tpu_custom_call.1} parent=5 // pred_check
        %p667 = pneg %p666
      $region50: #{tpu_custom_call.1} parent=5 // pred_check_branch
        %669 = sbr.rel (%p667) target = $region52
      $region51: #{tpu_custom_call.1} parent=5 // pred_region
        %s670 = ssub.s32 %s17, 2
        // Predicated region
        $region53: #{tpu_custom_call.1} parent=51 // pred_check
          %p671 = pneg %p156
        $region54: #{tpu_custom_call.1} parent=51 // pred_check_branch
          %673 = sbr.rel (%p671) target = $region56
        $region55: #{tpu_custom_call.1} parent=51 // pred_region
          %s674 = sand.u32 %s141, 1
          %s675 = scalar_lea.sflag [#allocation5], %s674
          %s676 = sand.u32 %s141, 1
          %s677 = smul.addr %s676, 8
          %s678 = scalar_lea.vmem [#allocation6], %s677
          %679 = dma.done %s675, 128
        $region56: #{tpu_custom_call.1} parent=51 // pred_fallthru
          _
      $region52: #{tpu_custom_call.1} parent=5 // pred_fallthru
        _
    $region6: #{tpu_custom_call.1} parent=1 // loop_footer
      %s21 = sadd.s32 1, %s17
    $region7: #{tpu_custom_call.1} parent=1 // loop_footer_branch
      %16 = sbr.rel target = $region3
    $region8: #{tpu_custom_call.1} parent=1 // loop_exit
      _
    %680 = vsyncpa [#allocation4], 1
    %s681 = scalar_lea.sflag [#allocation4], 1
    %682 = vsyncpa %s681, 1
    %683 = vsyncpa [#allocation5], 1
    %s684 = scalar_lea.sflag [#allocation5], 1
    %685 = vsyncpa %s684, 1

</llo_original>
